<compile_context>
chip_gen: v7x
topology: tpu7x:2x2x1
jax: 0.10.0
libtpu: 0.0.40
codegen_flags: <defaults>
</compile_context>

<pallas_src>
import functools
import math

import jax
import jax.numpy as jnp
from jax.experimental import pallas as pl
from jax.experimental.pallas import tpu as pltpu


def _grad_loss_kernel(*refs, two_inputs):
    if two_inputs:
        x_ref, xx_ref, mask_ref, out_ref, acc_ref = refs
        d3 = x_ref[...].astype(jnp.float32) - xx_ref[...].astype(jnp.float32)
    else:
        d_ref, mask_ref, out_ref, acc_ref = refs
        d3 = d_ref[...].astype(jnp.float32)

    s = pl.program_id(1)  # inner ("arbitrary") axis; axis 0 is the parallel core split

    @pl.when(s == 0)
    def _init():
        acc_ref[...] = jnp.zeros_like(acc_ref)

    TG, H, PW = d3.shape
    R = TG * H
    d = d3.reshape(R, PW)  # contiguous merge of leading dims (layout preserving)

    # 5-point Laplacian via XLU rolls; wrapped rows/cols are masked out below.
    lap = (pltpu.roll(d, 1, 0) + pltpu.roll(d, R - 1, 0)
           + pltpu.roll(d, 1, 1) + pltpu.roll(d, PW - 1, 1)
           - 4.0 * d)

    # Hoisted validity mask: one multiply instead of iota/mod/compare/where chain.
    m = jnp.abs(lap).reshape(TG, H, PW) * mask_ref[...]

    # Reduce over the plane-group axis (vreg-wise VPU adds) into a small accumulator.
    acc_ref[...] += m.sum(axis=0)

    # One cross-lane reduce + output write per core, only on the last step.
    @pl.when(s == pl.num_programs(1) - 1)
    def _finish():
        total = jnp.sum(acc_ref[...])
        rr = jax.lax.broadcasted_iota(jnp.int32, out_ref.shape, 0)
        cc = jax.lax.broadcasted_iota(jnp.int32, out_ref.shape, 1)
        out_ref[...] = jnp.where((rr == 0) & (cc == 0), total, 0.0)


def gradient_loss(x, xx, *, max_block_bytes=4 * 1024 * 1024,
                  vmem_limit_bytes=48 * 1024 * 1024):
    """x, xx: (N, C, H, W). Returns the scalar L1-mean of the difference of the
    depthwise (groups=C) valid 3x3 Laplacian responses (== Gradient_Loss.forward)."""
    N, C, H, W = x.shape
    assert xx.shape == x.shape
    assert H >= 3 and W >= 3, "valid 3x3 convolution needs H >= 3 and W >= 3"
    B = N * C
    itemsize = jnp.dtype(x.dtype).itemsize  # bf16 inputs stay bf16 in HBM

    xf = x.reshape(B, H, W)
    xxf = xx.reshape(B, H, W)

    NCORES = 2  # leading "parallel" grid axis (megacore on v7x; serial elsewhere)

    # Layout choice: pack planes along lanes so the last dim is a multiple of 128.
    two_inputs = (W >= 128) and (W % 128 == 0)
    if two_inputs:
        P, PW = 1, W                     # pack is a free reshape -> 2-input kernel
    elif W < 128:
        P = 128 // math.gcd(W, 128)      # PW = lcm(W, 128): fully dense lanes
        PW = P * W
    else:
        P = 1                            # W >= 128, not a 128 multiple: pad columns
        PW = pl.cdiv(W, 128) * 128

    # TODO(synk): for a single huge image where H*PW*itemsize exceeds the VMEM
    # budget, an H-axis grid split with a +-1-row halo would be needed.
    group_bytes = H * PW * itemsize
    per_input_cap = max_block_bytes // (2 if two_inputs else 1)
    G0 = pl.cdiv(B, P)
    TG = max(1, min(G0, per_input_cap // group_bytes))
    T = pl.cdiv(G0, TG)                  # number of TG-group blocks
    S = pl.cdiv(T, NCORES)               # inner grid extent per core
    G_pad = NCORES * S * TG
    B_pad = G_pad * P

    # Validity mask (interior of each packed image plane), computed once.
    rows = jnp.arange(H)
    row_ok = (rows >= 1) & (rows <= H - 2)
    cols = jnp.arange(PW)
    if P > 1:
        cw = cols % W
        col_ok = (cw >= 1) & (cw <= W - 2)
    else:
        col_ok = (cols >= 1) & (cols <= W - 2)   # also zeroes padded columns
    mask = (row_ok[:, None] & col_ok[None, :]).astype(jnp.float32)

    if two_inputs:
        def prep(a):
            if B_pad != B:
                a = jnp.pad(a, ((0, B_pad - B), (0, 0), (0, 0)))
            return a.reshape(G_pad, H, PW)
        ins = (prep(xf), prep(xxf), mask)
        in_specs = [
            pl.BlockSpec((TG, H, PW), lambda c, s: (c * S + s, 0, 0)),
            pl.BlockSpec((TG, H, PW), lambda c, s: (c * S + s, 0, 0)),
            pl.BlockSpec((H, PW), lambda c, s: (0, 0)),
        ]
        in_bytes = 2 * G_pad * H * PW * itemsize
    else:
        # Fused XLA pass: subtract + pad + pack in one HBM read of x,xx / write of d.
        d = xf - xxf
        pad_planes = B_pad - B
        pad_cols = PW - W if P == 1 else 0
        if pad_planes or pad_cols:
            d = jnp.pad(d, ((0, pad_planes), (0, 0), (0, pad_cols)))
        if P > 1:
            # (B_pad, H, W) -> (G_pad, P, H, W) -> (G_pad, H, P*W)
            d = d.reshape(G_pad, P, H, W).transpose(0, 2, 1, 3).reshape(G_pad, H, PW)
        else:
            d = d.reshape(G_pad, H, PW)
        ins = (d, mask)
        in_specs = [
            pl.BlockSpec((TG, H, PW), lambda c, s: (c * S + s, 0, 0)),
            pl.BlockSpec((H, PW), lambda c, s: (0, 0)),
        ]
        in_bytes = G_pad * H * PW * itemsize

    out_shape = jax.ShapeDtypeStruct((NCORES * 8, 128), jnp.float32)
    out_spec = pl.BlockSpec((8, 128), lambda c, s: (c, 0))

    n_valid = B * (H - 2) * (W - 2)
    cost = pl.CostEstimate(
        flops=9 * G_pad * H * PW,
        transcendentals=0,
        bytes_accessed=in_bytes + H * PW * 4 + NCORES * 8 * 128 * 4,
    )

    kernel = functools.partial(_grad_loss_kernel, two_inputs=two_inputs)

    partials = pl.pallas_call(
        kernel,
        out_shape=out_shape,
        grid_spec=pltpu.PrefetchScalarGridSpec(
            num_scalar_prefetch=0,
            grid=(NCORES, S),
            in_specs=in_specs,
            out_specs=out_spec,
            scratch_shapes=[pltpu.VMEM((H, PW), jnp.float32)],
        ),
        compiler_params=pltpu.CompilerParams(
            dimension_semantics=("parallel", "arbitrary"),
            vmem_limit_bytes=vmem_limit_bytes,
        ),
        cost_estimate=cost,
    )(*ins)

    return jnp.sum(partials) / jnp.float32(n_valid)


if __name__ == "__main__":
    key = jax.random.PRNGKey(0)
    k1, k2 = jax.random.split(key)
    N, C, H, W = 2, 3, 16, 16   # module hard-codes 3 channels (groups=3)
    x = jax.random.normal(k1, (N, C, H, W), dtype=jnp.float32)
    xx = jax.random.normal(k2, (N, C, H, W), dtype=jnp.float32)

    loss = gradient_loss(x, xx)
    jax.block_until_ready(loss)

    # Pure-JAX reference of the same math (valid depthwise Laplacian + L1 mean).
    def ref(a, b):
        def lap(t):
            return (t[..., :-2, 1:-1] + t[..., 2:, 1:-1]
                    + t[..., 1:-1, :-2] + t[..., 1:-1, 2:]
                    - 4.0 * t[..., 1:-1, 1:-1])
        return jnp.mean(jnp.abs(lap(a) - lap(b)))

    r = ref(x, xx)
    assert jnp.allclose(loss, r, rtol=1e-5, atol=1e-5), (float(loss), float(r))
    print("KERNEL_OK")
</pallas_src>

<mosaic_0001>
module attributes {stable_mosaic.version = 11 : i64} {
  func.func @_grad_loss_kernel(%arg0: i32, %arg1: i32, %arg2: memref<1x16x128xf32, #tpu.memory_space<vmem>>, %arg3: memref<16x128xf32, #tpu.memory_space<vmem>>, %arg4: memref<8x128xf32, #tpu.memory_space<vmem>>, %arg5: memref<16x128xf32, #tpu.memory_space<vmem>>) attributes {dimension_semantics = [#tpu.dimension_semantics<parallel>, #tpu.dimension_semantics<arbitrary>], iteration_bounds = array<i64: 2, 1>, scalar_prefetch = 0 : i64, scratch_operands = 1 : i64, tpu.core_type = #tpu.core_type<tc>, window_params = [{transform_indices = @transform_0, window_bounds = array<i64: 1, 16, 128>}, {pipeline_mode = #tpu.pipeline_mode<synchronous>, transform_indices = @transform_1, window_bounds = array<i64: 16, 128>}, {transform_indices = @transform_2, window_bounds = array<i64: 8, 128>}]} {
    %c0 = arith.constant 0 : index
    %c0_0 = arith.constant 0 : index
    %c0_1 = arith.constant 0 : index
    %0 = vector.load %arg2[%c0, %c0_0, %c0_1] : memref<1x16x128xf32, #tpu.memory_space<vmem>>, vector<1x16x128xf32>
    %c0_i32 = arith.constant 0 : i32
    %1 = arith.cmpi eq, %arg1, %c0_i32 : i32
    %2 = arith.extui %1 : i1 to i32
    %c0_i32_2 = arith.constant 0 : i32
    %3 = arith.cmpi ne, %2, %c0_i32_2 : i32
    scf.if %3 {
      %cst_13 = arith.constant 0.000000e+00 : f32
      %27 = vector.broadcast %cst_13 : f32 to vector<16x128xf32>
      %c0_14 = arith.constant 0 : index
      %c0_15 = arith.constant 0 : index
      %28 = vector.load %arg5[%c0_14, %c0_15] : memref<16x128xf32, #tpu.memory_space<vmem>>, vector<16x128xf32>
      tpu.vector_store %arg5[%c0_14, %c0_15], %27 {strides = array<i32>} : memref<16x128xf32, #tpu.memory_space<vmem>>, vector<16x128xf32>,
    } else {
    }
    %4 = vector.shape_cast %0 : vector<1x16x128xf32> to vector<16x128xf32>
    %c1_i32 = arith.constant 1 : i32
    %5 = tpu.dynamic_rotate %4 by %c1_i32 dim 0 : vector<16x128xf32>, i32 -> vector<16x128xf32>
    %c15_i32 = arith.constant 15 : i32
    %6 = tpu.dynamic_rotate %4 by %c15_i32 dim 0 : vector<16x128xf32>, i32 -> vector<16x128xf32>
    %7 = arith.addf %5, %6 : vector<16x128xf32>
    %c1_i32_3 = arith.constant 1 : i32
    %8 = tpu.dynamic_rotate %4 by %c1_i32_3 dim 1 : vector<16x128xf32>, i32 -> vector<16x128xf32>
    %9 = arith.addf %7, %8 : vector<16x128xf32>
    %c127_i32 = arith.constant 127 : i32
    %10 = tpu.dynamic_rotate %4 by %c127_i32 dim 1 : vector<16x128xf32>, i32 -> vector<16x128xf32>
    %11 = arith.addf %9, %10 : vector<16x128xf32>
    %cst = arith.constant 4.000000e+00 : f32
    %12 = vector.broadcast %cst : f32 to vector<16x128xf32>
    %13 = arith.mulf %12, %4 : vector<16x128xf32>
    %14 = arith.subf %11, %13 : vector<16x128xf32>
    %15 = math.absf %14 : vector<16x128xf32>
    %16 = vector.shape_cast %15 : vector<16x128xf32> to vector<1x16x128xf32>
    %c0_4 = arith.constant 0 : index
    %c0_5 = arith.constant 0 : index
    %17 = vector.load %arg3[%c0_4, %c0_5] : memref<16x128xf32, #tpu.memory_space<vmem>>, vector<16x128xf32>
    %18 = vector.shape_cast %17 : vector<16x128xf32> to vector<1x16x128xf32>
    %19 = arith.mulf %16, %18 : vector<1x16x128xf32>
    %c0_6 = arith.constant 0 : index
    %c0_7 = arith.constant 0 : index
    %20 = vector.load %arg5[%c0_6, %c0_7] : memref<16x128xf32, #tpu.memory_space<vmem>>, vector<16x128xf32>
    %cst_8 = arith.constant dense<0.000000e+00> : vector<16x128xf32>
    %21 = vector.multi_reduction <add>, %19, %cst_8 [0] : vector<1x16x128xf32> to vector<16x128xf32>
    %22 = arith.addf %20, %21 : vector<16x128xf32>
    %c0_9 = arith.constant 0 : index
    %c0_10 = arith.constant 0 : index
    %23 = vector.load %arg5[%c0_9, %c0_10] : memref<16x128xf32, #tpu.memory_space<vmem>>, vector<16x128xf32>
    tpu.vector_store %arg5[%c0_9, %c0_10], %22 {strides = array<i32>} : memref<16x128xf32, #tpu.memory_space<vmem>>, vector<16x128xf32>,
    %c0_i32_11 = arith.constant 0 : i32
    %24 = arith.cmpi eq, %arg1, %c0_i32_11 : i32
    %25 = arith.extui %24 : i1 to i32
    %c0_i32_12 = arith.constant 0 : i32
    %26 = arith.cmpi ne, %25, %c0_i32_12 : i32
    scf.if %26 {
      %c0_13 = arith.constant 0 : index
      %c0_14 = arith.constant 0 : index
      %27 = vector.load %arg5[%c0_13, %c0_14] : memref<16x128xf32, #tpu.memory_space<vmem>>, vector<16x128xf32>
      %28 = vector.shape_cast %27 : vector<16x128xf32> to vector<1x16x128xf32>
      %cst_15 = arith.constant dense<0.000000e+00> : vector<1xf32>
      %29 = vector.multi_reduction <add>, %28, %cst_15 [1, 2] : vector<1x16x128xf32> to vector<1xf32>
      %30 = vector.shape_cast %29 : vector<1xf32> to vector<1x1x1xf32>
      %31 = vector.extract %30[0, 0, 0] : f32 from vector<1x1x1xf32>
      %32 = tpu.iota {dimensions = array<i32: 0>} : vector<8x128xi32>
      %33 = tpu.iota {dimensions = array<i32: 1>} : vector<8x128xi32>
      %c0_i32_16 = arith.constant 0 : i32
      %34 = vector.broadcast %c0_i32_16 : i32 to vector<8x128xi32>
      %35 = arith.cmpi eq, %32, %34 : vector<8x128xi32>
      %c0_i32_17 = arith.constant 0 : i32
      %36 = vector.broadcast %c0_i32_17 : i32 to vector<8x128xi32>
      %37 = arith.cmpi eq, %33, %36 : vector<8x128xi32>
      %38 = arith.andi %35, %37 : vector<8x128xi1>
      %cst_18 = arith.constant 0.000000e+00 : f32
      %39 = vector.broadcast %31 : f32 to vector<8x128xf32>
      %40 = vector.broadcast %cst_18 : f32 to vector<8x128xf32>
      %41 = arith.select %38, %39, %40 : vector<8x128xi1>, vector<8x128xf32>
      %c0_19 = arith.constant 0 : index
      %c0_20 = arith.constant 0 : index
      %42 = vector.load %arg4[%c0_19, %c0_20] : memref<8x128xf32, #tpu.memory_space<vmem>>, vector<8x128xf32>
      tpu.vector_store %arg4[%c0_19, %c0_20], %41 {strides = array<i32>} : memref<8x128xf32, #tpu.memory_space<vmem>>, vector<8x128xf32>,
    } else {
    }
    return
  }
  func.func @transform_0(%arg0: i32, %arg1: i32) -> (i32, i32, i32) {
    %c1_i32 = arith.constant 1 : i32
    %0 = arith.muli %arg0, %c1_i32 : i32
    %1 = arith.addi %0, %arg1 : i32
    %c0_i32 = arith.constant 0 : i32
    %c0_i32_0 = arith.constant 0 : i32
    %c0_i32_1 = arith.constant 0 : i32
    return %1, %c0_i32, %c0_i32_0 : i32, i32, i32
  }
  func.func @transform_1(%arg0: i32, %arg1: i32) -> (i32, i32) {
    %c0_i32 = arith.constant 0 : i32
    %c0_i32_0 = arith.constant 0 : i32
    %c0_i32_1 = arith.constant 0 : i32
    return %c0_i32, %c0_i32_0 : i32, i32
  }
  func.func @transform_2(%arg0: i32, %arg1: i32) -> (i32, i32) {
    %c0_i32 = arith.constant 0 : i32
    %c0_i32_0 = arith.constant 0 : i32
    return %arg0, %c0_i32 : i32, i32
  }
}

</mosaic_0001>

<llo_original>
// kernel: tpu_custom_call.1
$region0: #{tpu_custom_call.1}
  #allocation0 [shape = 'u32[]', space=smem, size = 0x4, offset = 0x4, fixed_abs, tag = 'smem constant byte address 0x4 - core index']
  #allocation1 [shape = 'u32[144,128]{1,0:T(1,128)}', space=vmem, size = 0x12000, scoped, tag = 'internal scratch']
  #allocation2 [shape = 'f32[16,128]{1,0:T(8,128)}', space=vmem, size = 0x2000, scoped, tag = 'scratch operand']
  %s0 = inlined_call_operand.hbm [shape: f32[2,16,128], index: 0, kind: input, shape index: {}]
  %s1 = inlined_call_operand.hbm [shape: f32[16,128], index: 1, kind: input, shape index: {}]
  %s2 = inlined_call_operand.hbm [shape: f32[16,128], index: 2, kind: output, shape index: {}]
  %s3 = sld [smem:[#allocation0]]
  $region57: #{tpu_custom_call.1} parent=0
    _
  %s5 = ssub.s32 1, %s3
  %s6 = scalar_select 0, %s5, %s3
  $region1: #{tpu_custom_call.1} parent=0
    #allocation3 [shape = 'u8[16384]{0}', space=vmem, size = 0x4000, scoped, tag = 'input window, operand 0']
    #allocation4 [shape = 's32[2]{0}', space=sflag, size = 0x8, scoped, tag = 'scoped memory for tpu_custom_call.1']
    #allocation5 [shape = 's32[2]{0}', space=sflag, size = 0x8, scoped, tag = 'scoped memory for tpu_custom_call.1']
    #allocation6 [shape = 'u8[8192]{0}', space=vmem, size = 0x2000, scoped, tag = 'input window, operand 1, single buffered']
    #allocation7 [shape = 's32[1]{0}', space=sflag, size = 0x4, scoped, tag = 'scoped memory for tpu_custom_call.1']
    #allocation8 [shape = 'u8[8192]{0}', space=vmem, size = 0x2000, scoped, tag = 'output window, operand 0']
    %7 = vsyncpa [#allocation4], 0
    %s8 = scalar_lea.sflag [#allocation4], 1
    %9 = vsyncpa %s8, 0
    %10 = vsyncpa [#allocation7], 0
    %11 = vsyncpa [#allocation5], 0
    %s12 = scalar_lea.sflag [#allocation5], 1
    %13 = vsyncpa %s12, 0
    loop: start=0, step=1, limit=4
    $region2: #{tpu_custom_call.1} parent=1 // loop_pre_header
      _
    $region3: #{tpu_custom_call.1} parent=1 // loop_header
      %s15 = sphi 0, %s19
      %p16 = scmp.ge.s32.totalorder %s15, 4
      %s22 = sphi 0, %s34
      %s23 = sphi 0, %s30
      %s24 = sphi 0, %s22
      %s25 = sphi 0, %s23
      %s26 = sphi 0, %s24
      %s27 = sphi 0, %s25
      %s39 = sphi 0, %s41
      %s42 = sphi 0, %s39
      %s43 = sphi 0, %s42
      %s59 = sphi 0, %s43
      %s63 = sphi 0, %s63
      %s65 = sphi 0, %s63
      %s66 = sphi 0, %s65
      %s80 = sphi 0, %s66
      %s86 = sphi 0, %s88
      %s89 = sphi 0, %s86
      %s90 = sphi 0, %s89
      %s106 = sphi 0, %s90
    $region4: #{tpu_custom_call.1} parent=1 // loop_header_branch
      %18 = sbr.rel (%p16) target = $region8
    $region5: #{tpu_custom_call.1} parent=1 // loop_body
      %s20 = ssub.s32 %s15, 1
      %s21 = ssub.s32 %s15, 2
      %s28 = sadd.s32 1, %s23
      %p29 = scmp.ge.s32.totalorder %s28, 1
      %s30 = scalar_select %p29, 0, %s28
      %s31 = sadd.s32 1, %s22
      %s32 = scalar_select %p29, %s31, %s22
      %p33 = scmp.ge.s32.totalorder %s32, 2
      %s34 = scalar_select %p33, 0, %s32
      %s35 = sadd.s32 %s22, %s23
      %s36 = sadd.s32 %s34, %s30
      %s37 = ssub.s32 %s35, %s36
      %p38 = scmp.eq.s32.totalorder %s37, 0
      %s40 = sadd.s32 %s39, 1
      %s41 = scalar_select %p38, %s39, %s40
      %p44 = pneg %p38
      %p45 = scmp.eq.s32.totalorder %s15, 1
      %p46 = por %p44, %p45
      %p47 = scmp.ne.s32.totalorder %s39, %s42
      %p48 = scmp.eq.s32.totalorder %s15, 0
      %p49 = por %p47, %p48
      %p50 = scmp.ne.s32.totalorder %s39, %s42
      %p51 = scmp.eq.s32.totalorder %s20, 1
      %p52 = por %p50, %p51
      %p53 = scmp.ne.s32.totalorder %s42, %s43
      %p54 = scmp.eq.s32.totalorder %s20, 0
      %p55 = por %p53, %p54
      %p56 = scmp.ne.s32.totalorder %s42, %s43
      %p57 = scmp.eq.s32.totalorder %s21, 1
      %p58 = por %p56, %p57
      %p60 = scmp.ne.s32.totalorder %s43, %s59
      %p61 = scmp.eq.s32.totalorder %s21, 0
      %p62 = por %p60, %p61
      %s64 = sadd.s32 %s63, 1
      %p67 = scmp.eq.s32.totalorder %s15, 1
      %p68 = scmp.ne.s32.totalorder %s63, %s65
      %p69 = scmp.eq.s32.totalorder %s15, 0
      %p70 = por %p68, %p69
      %p71 = scmp.ne.s32.totalorder %s63, %s65
      %p72 = scmp.eq.s32.totalorder %s20, 1
      %p73 = por %p71, %p72
      %p74 = scmp.ne.s32.totalorder %s65, %s66
      %p75 = scmp.eq.s32.totalorder %s20, 0
      %p76 = por %p74, %p75
      %p77 = scmp.ne.s32.totalorder %s65, %s66
      %p78 = scmp.eq.s32.totalorder %s21, 1
      %p79 = por %p77, %p78
      %p81 = scmp.ne.s32.totalorder %s66, %s80
      %p82 = scmp.eq.s32.totalorder %s21, 0
      %p83 = por %p81, %p82
      %s84 = ssub.s32 %s22, %s34
      %p85 = scmp.eq.s32.totalorder %s84, 0
      %s87 = sadd.s32 %s86, 1
      %s88 = scalar_select %p85, %s86, %s87
      %p91 = pneg %p85
      %p92 = scmp.eq.s32.totalorder %s15, 1
      %p93 = por %p91, %p92
      %p94 = scmp.ne.s32.totalorder %s86, %s89
      %p95 = scmp.eq.s32.totalorder %s15, 0
      %p96 = por %p94, %p95
      %p97 = scmp.ne.s32.totalorder %s86, %s89
      %p98 = scmp.eq.s32.totalorder %s20, 1
      %p99 = por %p97, %p98
      %p100 = scmp.ne.s32.totalorder %s89, %s90
      %p101 = scmp.eq.s32.totalorder %s20, 0
      %p102 = por %p100, %p101
      %p103 = scmp.ne.s32.totalorder %s89, %s90
      %p104 = scmp.eq.s32.totalorder %s21, 1
      %p105 = por %p103, %p104
      %p107 = scmp.ne.s32.totalorder %s90, %s106
      %p108 = scmp.eq.s32.totalorder %s21, 0
      %p109 = por %p107, %p108
      %p110 = scmp.le.s32.totalorder 1, %s15
      %p111 = scmp.lt.s32.totalorder %s15, 3
      %p112 = pnand %p110, %p111
      %p113 = pneg %p112
      // Predicated region
      $region9: #{tpu_custom_call.1} parent=5 // pred_check
        _
      $region10: #{tpu_custom_call.1} parent=5 // pred_check_branch
        %115 = sbr.rel (%p112) target = $region12
      $region11: #{tpu_custom_call.1} parent=5 // pred_region
        %s116 = ssub.s32 %s15, 1
        // Predicated region
        $region13: #{tpu_custom_call.1} parent=11 // pred_check
          %p117 = pneg %p76
        $region14: #{tpu_custom_call.1} parent=11 // pred_check_branch
          %119 = sbr.rel (%p117) target = $region16
        $region15: #{tpu_custom_call.1} parent=11 // pred_region
          %s121 = ssub.s32 256, 256
          %122 = vsyncadd [#allocation7], %s121
          %s123 = sshll.u32 [#allocation6], 4
          %s124 = int_to_ptr.vmem [resolvable:$true] %s123
          %129 = dma.hbm_to_vmem [thread:$0]  %s1, 256, %s124, [#allocation7], 128, 128, 8
        $region16: #{tpu_custom_call.1} parent=11 // pred_fallthru
          _
      $region12: #{tpu_custom_call.1} parent=5 // pred_fallthru
        _
      %p130 = scmp.lt.s32.totalorder %s15, 2
      // Predicated region
      $region17: #{tpu_custom_call.1} parent=5 // pred_check
        %p131 = pneg %p130
      $region18: #{tpu_custom_call.1} parent=5 // pred_check_branch
        %133 = sbr.rel (%p131) target = $region20
      $region19: #{tpu_custom_call.1} parent=5 // pred_region
        // Predicated region
        $region21: #{tpu_custom_call.1} parent=19 // pred_check
          %p134 = pneg %p49
        $region22: #{tpu_custom_call.1} parent=19 // pred_check_branch
          %136 = sbr.rel (%p134) target = $region24
        $region23: #{tpu_custom_call.1} parent=19 // pred_region
          %s137 = sand.u32 %s39, 1
          %s138 = scalar_lea.sflag [#allocation4], %s137
          %s139 = sand.u32 %s39, 1
          %s140 = smul.addr %s139, 16
          %s141 = scalar_lea.vmem [#allocation3], %s140
          %s142 = sadd.s32 %s22, %s23
          %s144 = ssub.s32 256, 256
          %145 = vsyncadd %s138, %s144
          %s146 = smul.addr %s142, 2
          %s147 = smul.addr %s146, 128
          %s148 = scalar_lea.hbm %s0, %s147
          %s149 = sshll.u32 %s141, 4
          %s150 = int_to_ptr.vmem [resolvable:$true] %s149
          %155 = dma.hbm_to_vmem [thread:$0]  %s148, 256, %s150, %s138, 128, 128, 8
        $region24: #{tpu_custom_call.1} parent=19 // pred_fallthru
          _
      $region20: #{tpu_custom_call.1} parent=5 // pred_fallthru
        _
      %p156 = scmp.le.s32.totalorder 1, %s15
      %p157 = scmp.lt.s32.totalorder %s15, 3
      %p158 = pnand %p156, %p157
      %p159 = pneg %p158
      // Predicated region
      $region25: #{tpu_custom_call.1} parent=5 // pred_check
        _
      $region26: #{tpu_custom_call.1} parent=5 // pred_check_branch
        %161 = sbr.rel (%p158) target = $region28
      $region27: #{tpu_custom_call.1} parent=5 // pred_region
        %s162 = ssub.s32 %s15, 1
        %s163 = sand.u32 %s42, 1
        %s164 = scalar_lea.sflag [#allocation4], %s163
        %s165 = sand.u32 %s42, 1
        %s166 = smul.addr %s165, 16
        %s167 = scalar_lea.vmem [#allocation3], %s166
        // Predicated region
        $region29: #{tpu_custom_call.1} parent=27 // pred_check
          %p168 = pneg %p55
        $region30: #{tpu_custom_call.1} parent=27 // pred_check_branch
          %170 = sbr.rel (%p168) target = $region32
        $region31: #{tpu_custom_call.1} parent=27 // pred_region
          %171 = dma.done %s164, 256
        $region32: #{tpu_custom_call.1} parent=27 // pred_fallthru
          _
        // Predicated region
        $region33: #{tpu_custom_call.1} parent=27 // pred_check
          %p172 = pneg %p76
        $region34: #{tpu_custom_call.1} parent=27 // pred_check_branch
          %174 = sbr.rel (%p172) target = $region36
        $region35: #{tpu_custom_call.1} parent=27 // pred_region
          %175 = dma.done [#allocation7], 256
        $region36: #{tpu_custom_call.1} parent=27 // pred_fallthru
          _
        %s176 = sand.u32 %s42, 1
        %s177 = scalar_lea.sflag [#allocation4], %s176
        %s178 = sand.u32 %s42, 1
        %s179 = smul.addr %s178, 16
        %s180 = scalar_lea.vmem [#allocation3], %s179
        %p181 = pneg %p55
        %p182 = pneg %p52
        %p183 = pneg %p76
        %p184 = pneg %p73
        %p185 = pneg %p102
        %p186 = pneg %p99
        %s187 = sand.u32 %s89, 1
        %s188 = scalar_lea.sflag [#allocation5], %s187
        %s189 = sand.u32 %s89, 1
        %s190 = smul.addr %s189, 8
        %s191 = scalar_lea.vmem [#allocation8], %s190
        %s192 = sadd.s32 %s24, %s25
        %v193 = vld [vmem:[%s167] sm:$0xff]
        %v194 = vld [vmem:[%s167 + $0x8] sm:$0xff]
        %p195 = scmp.eq.s32.totalorder %s25, 0
        // Predicated region
        $region37: #{tpu_custom_call.1} parent=27 // pred_check
          %p196 = pneg %p195
        $region38: #{tpu_custom_call.1} parent=27 // pred_check_branch
          %198 = sbr.rel (%p196) target = $region40
        $region39: #{tpu_custom_call.1} parent=27 // pred_region
          %199 = vst [vmem:[#allocation2] sm:$0xff] 0.0
          %200 = vst [vmem:[#allocation2 + $0x8] sm:$0xff] 0.0
        $region40: #{tpu_custom_call.1} parent=27 // pred_fallthru
          _
        %v201 = vrot.slane %v193, 7
        %v202 = vrot.slane %v194, 7
        %v203 = vlaneseq
        %v204 = vshrl.u32 %v203, 7
        %vm205 = vcmp.lt.s32.totalorder %v204, 1
        %v206 = vsel %vm205, %v201, %v202
        %v207 = vsel %vm205, %v202, %v201
        %v208 = vrot.slane %v193, 1
        %v209 = vrot.slane %v194, 1
        %vm210 = vcmp.lt.s32.totalorder %v204, 7
        %v211 = vsel %vm210, %v208, %v209
        %v212 = vsel %vm210, %v209, %v208
        %v213 = vadd.f32 %v207, %v211
        %v214 = vadd.f32 %v206, %v212
        %215 = vrot.lane.b32.xlu0 %v193, 1
        %v216 = vpop.permute.xlu0 %215
        %217 = vrot.lane.b32.xlu0 %v194, 1
        %v218 = vpop.permute.xlu0 %217
        %v219 = vadd.f32 %v213, %v216
        %v220 = vadd.f32 %v214, %v218
        %221 = vrot.lane.b32.xlu0 %v193, 127
        %v222 = vpop.permute.xlu0 %221
        %223 = vrot.lane.b32.xlu0 %v194, 127
        %v224 = vpop.permute.xlu0 %223
        %v225 = vadd.f32 %v219, %v222
        %v226 = vadd.f32 %v220, %v224
        %v227 = vmul.f32 %v193, 4.0
        %v228 = vmul.f32 %v194, 4.0
        %v229 = vsub.f32 %v225, %v227
        %v230 = vsub.f32 %v226, %v228
        %v231 = vand.u32 2147483647, %v229
        %v232 = vand.u32 2147483647, %v230
        %v233 = vld [vmem:[#allocation6] sm:$0xff]
        %v234 = vld [vmem:[#allocation6 + $0x8] sm:$0xff]
        %v235 = vmul.f32 %v231, %v233
        %v236 = vmul.f32 %v232, %v234
        %v237 = vld [vmem:[#allocation2] sm:$0xff]
        %v238 = vld [vmem:[#allocation2 + $0x8] sm:$0xff]
        %v239 = vadd.f32 %v235, 0.0
        %v240 = vadd.f32 %v236, 0.0
        %v241 = vadd.f32 %v237, %v239
        %v242 = vadd.f32 %v238, %v240
        %243 = vst [vmem:[#allocation2] sm:$0xff] %v241
        %244 = vst [vmem:[#allocation2 + $0x8] sm:$0xff] %v242
        // Predicated region
        $region41: #{tpu_custom_call.1} parent=27 // pred_check
          %p245 = pneg %p195
        $region42: #{tpu_custom_call.1} parent=27 // pred_check_branch
          %247 = sbr.rel (%p245) target = $region44
        $region43: #{tpu_custom_call.1} parent=27 // pred_region
          %v248 = vld [vmem:[#allocation2] sm:$0xff]
          %v249 = vld [vmem:[#allocation2 + $0x8] sm:$0xff]
          %v250 = vadd.f32 %v248, %v249
          %251 = vadd.xlane.f32.xlu0 %v250
          %v252 = vpop.xlane.xlu0 %251
          %v253 = vrot.slane %v252, 4
          %v254 = vadd.f32 %v252, %v253
          %v255 = vrot.slane %v254, 2
          %v256 = vadd.f32 %v254, %v255
          %v257 = vrot.slane %v256, 1
          %v258 = vadd.f32 %v256, %v257
          %s259 = vtos %v258
          %v260 = vlaneseq
          %v261 = vand.u32 %v260, 127
          %vm262 = vcmp.eq.s32.totalorder %v204, 0
          %vm263 = vcmp.eq.s32.totalorder %v261, 0
          %vm264 = vmand %vm262, %vm263
          %v265 = vstv %s259
          %v266 = vsel %vm264, %v265, 0.0
          %267 = vst [vmem:[%s191] sm:$0xff] %v266
        $region44: #{tpu_custom_call.1} parent=27 // pred_fallthru
          _
        %s268 = sand.u32 %s89, 1
        %s269 = scalar_lea.sflag [#allocation5], %s268
        %s270 = sand.u32 %s89, 1
        %s271 = smul.addr %s270, 8
        %s272 = scalar_lea.vmem [#allocation8], %s271
        // Predicated region
        $region45: #{tpu_custom_call.1} parent=27 // pred_check
          %p273 = pneg %p99
        $region46: #{tpu_custom_call.1} parent=27 // pred_check_branch
          %275 = sbr.rel (%p273) target = $region48
        $region47: #{tpu_custom_call.1} parent=27 // pred_region
          %s277 = ssub.s32 128, 128
          %278 = vsyncadd %s269, %s277
          %s279 = smul.addr %s24, 128
          %s280 = scalar_lea.hbm %s2, %s279
          %s282 = sshll.u32 %s272, 4
          %s283 = int_to_ptr.vmem [resolvable:$true] %s282
          %285 = dma.vmem_to_hbm [thread:$0]  %s283, 128, %s280, %s269
        $region48: #{tpu_custom_call.1} parent=27 // pred_fallthru
          _
      $region28: #{tpu_custom_call.1} parent=5 // pred_fallthru
        _
      %p286 = scmp.le.s32.totalorder 2, %s15
      // Predicated region
      $region49: #{tpu_custom_call.1} parent=5 // pred_check
        %p287 = pneg %p286
      $region50: #{tpu_custom_call.1} parent=5 // pred_check_branch
        %289 = sbr.rel (%p287) target = $region52
      $region51: #{tpu_custom_call.1} parent=5 // pred_region
        %s290 = ssub.s32 %s15, 2
        // Predicated region
        $region53: #{tpu_custom_call.1} parent=51 // pred_check
          %p291 = pneg %p105
        $region54: #{tpu_custom_call.1} parent=51 // pred_check_branch
          %293 = sbr.rel (%p291) target = $region56
        $region55: #{tpu_custom_call.1} parent=51 // pred_region
          %s294 = sand.u32 %s90, 1
          %s295 = scalar_lea.sflag [#allocation5], %s294
          %s296 = sand.u32 %s90, 1
          %s297 = smul.addr %s296, 8
          %s298 = scalar_lea.vmem [#allocation8], %s297
          %299 = dma.done %s295, 128
        $region56: #{tpu_custom_call.1} parent=51 // pred_fallthru
          _
      $region52: #{tpu_custom_call.1} parent=5 // pred_fallthru
        _
    $region6: #{tpu_custom_call.1} parent=1 // loop_footer
      %s19 = sadd.s32 1, %s15
    $region7: #{tpu_custom_call.1} parent=1 // loop_footer_branch
      %14 = sbr.rel target = $region3
    $region8: #{tpu_custom_call.1} parent=1 // loop_exit
      _
    %300 = vsyncpa [#allocation4], 1
    %s301 = scalar_lea.sflag [#allocation4], 1
    %302 = vsyncpa %s301, 1
    %303 = vsyncpa [#allocation7], 1
    %304 = vsyncpa [#allocation5], 1
    %s305 = scalar_lea.sflag [#allocation5], 1
    %306 = vsyncpa %s305, 1

</llo_original>
